<compile_context>
chip_gen: v5e
topology: v5e:2x2
jax: 0.10.0
libtpu: 0.0.40
codegen_flags: <defaults>
</compile_context>

<pallas_src>
import math

import jax
import jax.numpy as jnp
from jax import lax
from jax.experimental import pallas as pl
from jax.experimental.pallas import tpu as pltpu


def _level_geometry(H, W, level):
    """kernel/stride/padding/output-size exactly as the PyTorch forward computes."""
    k_h, k_w = math.ceil(H / level), math.ceil(W / level)
    s_h, s_w = k_h, k_w
    p_h = (k_h * level - H + 1) // 2
    p_w = (k_w * level - W + 1) // 2
    oh = (H + 2 * p_h - k_h) // s_h + 1
    ow = (W + 2 * p_w - k_w) // s_w + 1
    return k_h, k_w, s_h, s_w, p_h, p_w, oh, ow


def _vmem_budgets():
    """(physical_vmem, vmem_limit, per_block_budget) in bytes, per TPU generation."""
    phys = 0
    try:
        phys = int(getattr(pltpu.get_tpu_info(), "vmem_capacity_bytes", 0))
    except Exception:
        phys = 0
    if phys >= (100 << 20):              # v5e / v6e: 128 MiB VMEM
        return phys, 64 << 20, 40 << 20
    if phys <= 0:                        # unknown: be conservative (v7x-safe)
        phys = 64 << 20
    return phys, 32 << 20, 18 << 20      # v7x: 64 MiB physical, 32 MiB scoped


def _choose_c_tile(N, C, H, W, in_itemsize, block_budget):
    """Channel tile: a multiple of 128 dividing C (BlockSpec lane rule), else full C."""
    cands = [t for t in (2048, 1024, 512, 256, 128) if C % t == 0]
    if not cands:
        return C  # small / non-128-multiple channel count: single full-C block
    # Cap 1: the (W, TC) f32 H-reduce accumulator should stay ~<= 32 vregs (128 KiB).
    cap_vreg = (128 * 1024) // (4 * max(W, 1))
    # Cap 2: 2x input block + f32 cast temp + f32 transposed scratch per TC channel.
    per_tc = H * W * (2 * in_itemsize + 8)
    cap_vmem = block_budget // max(per_tc, 1)
    ok = [t for t in cands if t <= cap_vreg and t <= cap_vmem]
    if not ok:
        ok = [cands[-1]]  # smallest 128-multiple; wrapper re-checks the VMEM budget
    for t in ok:  # descending: largest tile that still leaves >= 4 grid steps
        if N * (C // t) >= 4:
            return t
    return ok[0]  # cannot reach 4 steps with any tile: fewest steps / least overhead


def _make_spp_kernel(H, W, pooltype, geoms, total_cells, num_levels):
    is_max = (pooltype == 'maxpool')
    derive_l1 = num_levels >= 2

    def kernel(x_ref, o_ref, xt_ref):
        # x_ref : (1, TC, H*W) input block (channels on sublanes, spatial on lanes).
        # o_ref : (1, total_cells, TC) lane-dense output block.
        # xt_ref: (H*W, TC) f32 scratch — transposed block, channels on lanes.
        xt_ref[...] = jnp.transpose(x_ref[0].astype(jnp.float32), (1, 0))

        per_level = [None] * num_levels
        l2_raw = None
        for li, (k_h, k_w, s_h, s_w, p_h, p_w, oh, ow) in enumerate(geoms):
            level = li + 1
            if level == 1 and derive_l1:
                continue  # derived below from level-2 raw window values
            inv_area = 1.0 / float(k_h * k_w)
            cells, raws = [], []
            for oi in range(oh):
                r0 = oi * s_h - p_h
                r0c, r1c = max(r0, 0), min(r0 + k_h, H)
                # Step 1: H-window reduce — pure elementwise VALU ops over
                # full-lane (W, TC) planes.  (F.max_pool2d pads with -inf, so
                # clipping the window is exact; zero padding adds 0 to avg sums.)
                rows = xt_ref[r0c * W:(r0c + 1) * W, :]
                for r in range(r0c + 1, r1c):
                    nxt = xt_ref[r * W:(r + 1) * W, :]
                    rows = jnp.maximum(rows, nxt) if is_max else rows + nxt
                # Step 2: W-window reduce — tiny sublane reduce per output cell.
                for oj in range(ow):
                    c0 = oj * s_w - p_w
                    c0c, c1c = max(c0, 0), min(c0 + k_w, W)
                    strip = rows[c0c:c1c, :]
                    if is_max:
                        raw = jnp.max(strip, axis=0, keepdims=True)
                        cell = raw
                    else:
                        # count_include_pad=True: divisor is the full kernel area.
                        raw = jnp.sum(strip, axis=0, keepdims=True)
                        cell = raw * inv_area
                    raws.append(raw)
                    cells.append(cell)
            per_level[li] = cells
            if level == 2:
                l2_raw = raws

        if derive_l1:
            # Level-2 clipped windows exactly partition the image, so the level-1
            # global pool is a cheap combine of level-2 raw window values.
            g = l2_raw[0]
            for r in l2_raw[1:]:
                g = jnp.maximum(g, r) if is_max else g + r
            k_h1, k_w1 = geoms[0][0], geoms[0][1]
            per_level[0] = [g if is_max else g * (1.0 / float(k_h1 * k_w1))]

        # Single coalesced lane-dense store for all levels.
        out = jnp.concatenate([c for lvl in per_level for c in lvl], axis=0)
        o_ref[0, :, :] = out.astype(o_ref.dtype)

    return kernel


def spp_forward(x, num_levels=3, pooltype='maxpool'):
    """Pallas implementation of SPPModule.forward (conv_cfg=None)."""
    if pooltype not in ('maxpool', 'avgpool'):
        raise ValueError('pool not support')

    N, C, H, W = x.shape
    geoms = [_level_geometry(H, W, lvl) for lvl in range(1, num_levels + 1)]
    for (k_h, k_w, _, _, p_h, p_w, _, _) in geoms:
        # Same restriction PyTorch enforces (pad <= kernel // 2); also guarantees
        # every clipped window is non-empty.
        if p_h > k_h // 2 or p_w > k_w // 2:
            raise ValueError(
                'SPP level too large for input size (padding exceeds half kernel).')
    total_cells = sum(oh * ow for (*_, oh, ow) in geoms)

    # Pad channels to a multiple of 8 (sublane tile) so the in-kernel transpose is
    # tile-aligned; real CNN channel counts already are (then this is a no-op).
    Cp = C if C % 8 == 0 else C + (8 - C % 8)
    xp = x if Cp == C else jnp.pad(x, ((0, 0), (0, Cp - C), (0, 0), (0, 0)))
    # Contiguous-merge reshape: free (no extra HBM pass).
    xp = xp.reshape(N, Cp, H * W)

    phys_vmem, vmem_limit, block_budget = _vmem_budgets()
    itemsize = x.dtype.itemsize
    TC = _choose_c_tile(N, Cp, H, W, itemsize, block_budget)

    # VMEM accounting: 2x input block (pipeline) + f32 cast temp + f32 transposed
    # scratch + 2x (tiny) output block + margin.
    need = (H * W * TC * (2 * itemsize + 8)
            + 2 * total_cells * TC * itemsize + (2 << 20))
    vmem_limit = int(max(vmem_limit, need))
    if vmem_limit > phys_vmem - (8 << 20):
        raise ValueError('SPP block does not fit in VMEM; reduce channels/resolution.')

    grid = (N, Cp // TC)
    kernel = _make_spp_kernel(H, W, pooltype, geoms, total_cells, num_levels)
    out = pl.pallas_call(
        kernel,
        out_shape=jax.ShapeDtypeStruct((N, total_cells, Cp), x.dtype),
        grid_spec=pltpu.PrefetchScalarGridSpec(
            num_scalar_prefetch=0,
            grid=grid,
            in_specs=[pl.BlockSpec((1, TC, H * W), lambda n, c: (n, c, 0))],
            out_specs=pl.BlockSpec((1, total_cells, TC), lambda n, c: (n, 0, c)),
            scratch_shapes=[pltpu.VMEM((H * W, TC), jnp.float32)],
        ),
        compiler_params=pltpu.CompilerParams(
            dimension_semantics=("parallel", "parallel"),
            vmem_limit_bytes=vmem_limit,
        ),
    )(xp)

    if Cp != C:
        out = out[:, :, :C]

    # Restore torch flatten order (c -> oh -> ow) per level; tensors here are tiny.
    feats, off = [], 0
    for (*_, oh, ow) in geoms:
        n_cells = oh * ow
        lvl = out[:, off:off + n_cells, :]                    # (N, cells, C)
        feats.append(jnp.transpose(lvl, (0, 2, 1)).reshape(N, -1))
        off += n_cells
    return jnp.concatenate(feats, axis=1)


def _maxpool_reference(x, num_levels):
    """Pure-JAX reference (lax.reduce_window) matching F.max_pool2d semantics."""
    N, C, H, W = x.shape
    feats = []
    for i in range(num_levels):
        level = i + 1
        k_h, k_w, s_h, s_w, p_h, p_w, _, _ = _level_geometry(H, W, level)
        pooled = lax.reduce_window(
            x, -jnp.inf, lax.max,
            window_dimensions=(1, 1, k_h, k_w),
            window_strides=(1, 1, s_h, s_w),
            padding=((0, 0), (0, 0), (p_h, p_h), (p_w, p_w)),
        )
        feats.append(pooled.reshape(N, -1))
    return jnp.concatenate(feats, axis=1)


def _avgpool_reference(x, num_levels):
    """F.avg_pool2d (count_include_pad=True) reference."""
    N, C, H, W = x.shape
    feats = []
    for i in range(num_levels):
        level = i + 1
        k_h, k_w, s_h, s_w, p_h, p_w, _, _ = _level_geometry(H, W, level)
        summed = lax.reduce_window(
            x.astype(jnp.float32), 0.0, lax.add,
            window_dimensions=(1, 1, k_h, k_w),
            window_strides=(1, 1, s_h, s_w),
            padding=((0, 0), (0, 0), (p_h, p_h), (p_w, p_w)),
        )
        pooled = (summed / float(k_h * k_w)).astype(x.dtype)
        feats.append(pooled.reshape(N, -1))
    return jnp.concatenate(feats, axis=1)


if __name__ == "__main__":
    key = jax.random.PRNGKey(0)
    N, C, H, W = 2, 4, 16, 16
    num_levels = 3
    x = jax.random.normal(key, (N, C, H, W), dtype=jnp.float32)

    # maxpool path (module default)
    out = jax.block_until_ready(spp_forward(x, num_levels=num_levels, pooltype='maxpool'))
    expected_features = C * sum((i + 1) ** 2 for i in range(num_levels))
    assert out.shape == (N, expected_features), out.shape
    ref = jax.block_until_ready(_maxpool_reference(x, num_levels))
    assert jnp.allclose(out, ref), "mismatch vs reference max-pool SPP"

    # avgpool path
    out_avg = jax.block_until_ready(spp_forward(x, num_levels=num_levels, pooltype='avgpool'))
    ref_avg = jax.block_until_ready(_avgpool_reference(x, num_levels))
    assert jnp.allclose(out_avg, ref_avg, rtol=1e-5, atol=1e-5), "mismatch vs reference avg-pool SPP"

    print("KERNEL_OK")
</pallas_src>

<mosaic_0001>
module attributes {stable_mosaic.version = 11 : i64} {
  func.func @kernel(%arg0: i32, %arg1: i32, %arg2: memref<1x8x256xf32, #tpu.memory_space<vmem>>, %arg3: memref<1x14x8xf32, #tpu.memory_space<vmem>>, %arg4: memref<256x8xf32, #tpu.memory_space<vmem>>) attributes {dimension_semantics = [#tpu.dimension_semantics<parallel>, #tpu.dimension_semantics<parallel>], iteration_bounds = array<i64: 2, 1>, scalar_prefetch = 0 : i64, scratch_operands = 1 : i64, tpu.core_type = #tpu.core_type<tc>, window_params = [{transform_indices = @transform_0, window_bounds = array<i64: 1, 8, 256>}, {transform_indices = @transform_1, window_bounds = array<i64: 1, 14, 8>}]} {
    %c0 = arith.constant 0 : index
    %c0_0 = arith.constant 0 : index
    %c0_1 = arith.constant 0 : index
    %0 = vector.load %arg2[%c0, %c0_0, %c0_1] : memref<1x8x256xf32, #tpu.memory_space<vmem>>, vector<1x8x256xf32>
    %1 = vector.shape_cast %0 : vector<1x8x256xf32> to vector<8x256xf32>
    %2 = tpu.transpose %1, [1, 0] : vector<8x256xf32> -> vector<256x8xf32>
    %c0_2 = arith.constant 0 : index
    %c0_3 = arith.constant 0 : index
    %3 = vector.load %arg4[%c0_2, %c0_3] : memref<256x8xf32, #tpu.memory_space<vmem>>, vector<256x8xf32>
    tpu.vector_store %arg4[%c0_2, %c0_3], %2 {strides = array<i32>} : memref<256x8xf32, #tpu.memory_space<vmem>>, vector<256x8xf32>,
    %c0_4 = arith.constant 0 : index
    %c0_5 = arith.constant 0 : index
    %4 = vector.load %arg4[%c0_4, %c0_5] : memref<256x8xf32, #tpu.memory_space<vmem>>, vector<16x8xf32>
    %c16 = arith.constant 16 : index
    %c0_6 = arith.constant 0 : index
    %5 = vector.load %arg4[%c16, %c0_6] : memref<256x8xf32, #tpu.memory_space<vmem>>, vector<16x8xf32>
    %6 = arith.maximumf %4, %5 : vector<16x8xf32>
    %c32 = arith.constant 32 : index
    %c0_7 = arith.constant 0 : index
    %7 = vector.load %arg4[%c32, %c0_7] : memref<256x8xf32, #tpu.memory_space<vmem>>, vector<16x8xf32>
    %8 = arith.maximumf %6, %7 : vector<16x8xf32>
    %c48 = arith.constant 48 : index
    %c0_8 = arith.constant 0 : index
    %9 = vector.load %arg4[%c48, %c0_8] : memref<256x8xf32, #tpu.memory_space<vmem>>, vector<16x8xf32>
    %10 = arith.maximumf %8, %9 : vector<16x8xf32>
    %c64 = arith.constant 64 : index
    %c0_9 = arith.constant 0 : index
    %11 = vector.load %arg4[%c64, %c0_9] : memref<256x8xf32, #tpu.memory_space<vmem>>, vector<16x8xf32>
    %12 = arith.maximumf %10, %11 : vector<16x8xf32>
    %c80 = arith.constant 80 : index
    %c0_10 = arith.constant 0 : index
    %13 = vector.load %arg4[%c80, %c0_10] : memref<256x8xf32, #tpu.memory_space<vmem>>, vector<16x8xf32>
    %14 = arith.maximumf %12, %13 : vector<16x8xf32>
    %c96 = arith.constant 96 : index
    %c0_11 = arith.constant 0 : index
    %15 = vector.load %arg4[%c96, %c0_11] : memref<256x8xf32, #tpu.memory_space<vmem>>, vector<16x8xf32>
    %16 = arith.maximumf %14, %15 : vector<16x8xf32>
    %c112 = arith.constant 112 : index
    %c0_12 = arith.constant 0 : index
    %17 = vector.load %arg4[%c112, %c0_12] : memref<256x8xf32, #tpu.memory_space<vmem>>, vector<16x8xf32>
    %18 = arith.maximumf %16, %17 : vector<16x8xf32>
    %19 = vector.extract_strided_slice %18 {offsets = [0, 0], sizes = [8, 8], strides = [1, 1]} : vector<16x8xf32> to vector<8x8xf32>
    %cst = arith.constant dense<0xFF800000> : vector<8xf32>
    %20 = vector.multi_reduction <maximumf>, %19, %cst [0] : vector<8x8xf32> to vector<8xf32>
    %21 = vector.shape_cast %20 : vector<8xf32> to vector<1x8xf32>
    %22 = vector.extract_strided_slice %18 {offsets = [8, 0], sizes = [8, 8], strides = [1, 1]} : vector<16x8xf32> to vector<8x8xf32>
    %cst_13 = arith.constant dense<0xFF800000> : vector<8xf32>
    %23 = vector.multi_reduction <maximumf>, %22, %cst_13 [0] : vector<8x8xf32> to vector<8xf32>
    %24 = vector.shape_cast %23 : vector<8xf32> to vector<1x8xf32>
    %c128 = arith.constant 128 : index
    %c0_14 = arith.constant 0 : index
    %25 = vector.load %arg4[%c128, %c0_14] : memref<256x8xf32, #tpu.memory_space<vmem>>, vector<16x8xf32>
    %c144 = arith.constant 144 : index
    %c0_15 = arith.constant 0 : index
    %26 = vector.load %arg4[%c144, %c0_15] : memref<256x8xf32, #tpu.memory_space<vmem>>, vector<16x8xf32>
    %27 = arith.maximumf %25, %26 : vector<16x8xf32>
    %c160 = arith.constant 160 : index
    %c0_16 = arith.constant 0 : index
    %28 = vector.load %arg4[%c160, %c0_16] : memref<256x8xf32, #tpu.memory_space<vmem>>, vector<16x8xf32>
    %29 = arith.maximumf %27, %28 : vector<16x8xf32>
    %c176 = arith.constant 176 : index
    %c0_17 = arith.constant 0 : index
    %30 = vector.load %arg4[%c176, %c0_17] : memref<256x8xf32, #tpu.memory_space<vmem>>, vector<16x8xf32>
    %31 = arith.maximumf %29, %30 : vector<16x8xf32>
    %c192 = arith.constant 192 : index
    %c0_18 = arith.constant 0 : index
    %32 = vector.load %arg4[%c192, %c0_18] : memref<256x8xf32, #tpu.memory_space<vmem>>, vector<16x8xf32>
    %33 = arith.maximumf %31, %32 : vector<16x8xf32>
    %c208 = arith.constant 208 : index
    %c0_19 = arith.constant 0 : index
    %34 = vector.load %arg4[%c208, %c0_19] : memref<256x8xf32, #tpu.memory_space<vmem>>, vector<16x8xf32>
    %35 = arith.maximumf %33, %34 : vector<16x8xf32>
    %c224 = arith.constant 224 : index
    %c0_20 = arith.constant 0 : index
    %36 = vector.load %arg4[%c224, %c0_20] : memref<256x8xf32, #tpu.memory_space<vmem>>, vector<16x8xf32>
    %37 = arith.maximumf %35, %36 : vector<16x8xf32>
    %c240 = arith.constant 240 : index
    %c0_21 = arith.constant 0 : index
    %38 = vector.load %arg4[%c240, %c0_21] : memref<256x8xf32, #tpu.memory_space<vmem>>, vector<16x8xf32>
    %39 = arith.maximumf %37, %38 : vector<16x8xf32>
    %40 = vector.extract_strided_slice %39 {offsets = [0, 0], sizes = [8, 8], strides = [1, 1]} : vector<16x8xf32> to vector<8x8xf32>
    %cst_22 = arith.constant dense<0xFF800000> : vector<8xf32>
    %41 = vector.multi_reduction <maximumf>, %40, %cst_22 [0] : vector<8x8xf32> to vector<8xf32>
    %42 = vector.shape_cast %41 : vector<8xf32> to vector<1x8xf32>
    %43 = vector.extract_strided_slice %39 {offsets = [8, 0], sizes = [8, 8], strides = [1, 1]} : vector<16x8xf32> to vector<8x8xf32>
    %cst_23 = arith.constant dense<0xFF800000> : vector<8xf32>
    %44 = vector.multi_reduction <maximumf>, %43, %cst_23 [0] : vector<8x8xf32> to vector<8xf32>
    %45 = vector.shape_cast %44 : vector<8xf32> to vector<1x8xf32>
    %c0_24 = arith.constant 0 : index
    %c0_25 = arith.constant 0 : index
    %46 = vector.load %arg4[%c0_24, %c0_25] : memref<256x8xf32, #tpu.memory_space<vmem>>, vector<16x8xf32>
    %c16_26 = arith.constant 16 : index
    %c0_27 = arith.constant 0 : index
    %47 = vector.load %arg4[%c16_26, %c0_27] : memref<256x8xf32, #tpu.memory_space<vmem>>, vector<16x8xf32>
    %48 = arith.maximumf %46, %47 : vector<16x8xf32>
    %c32_28 = arith.constant 32 : index
    %c0_29 = arith.constant 0 : index
    %49 = vector.load %arg4[%c32_28, %c0_29] : memref<256x8xf32, #tpu.memory_space<vmem>>, vector<16x8xf32>
    %50 = arith.maximumf %48, %49 : vector<16x8xf32>
    %c48_30 = arith.constant 48 : index
    %c0_31 = arith.constant 0 : index
    %51 = vector.load %arg4[%c48_30, %c0_31] : memref<256x8xf32, #tpu.memory_space<vmem>>, vector<16x8xf32>
    %52 = arith.maximumf %50, %51 : vector<16x8xf32>
    %c64_32 = arith.constant 64 : index
    %c0_33 = arith.constant 0 : index
    %53 = vector.load %arg4[%c64_32, %c0_33] : memref<256x8xf32, #tpu.memory_space<vmem>>, vector<16x8xf32>
    %54 = arith.maximumf %52, %53 : vector<16x8xf32>
    %55 = vector.extract_strided_slice %54 {offsets = [0, 0], sizes = [5, 8], strides = [1, 1]} : vector<16x8xf32> to vector<5x8xf32>
    %cst_34 = arith.constant dense<0xFF800000> : vector<8xf32>
    %56 = vector.multi_reduction <maximumf>, %55, %cst_34 [0] : vector<5x8xf32> to vector<8xf32>
    %57 = vector.shape_cast %56 : vector<8xf32> to vector<1x8xf32>
    %58 = vector.extract_strided_slice %54 {offsets = [5, 0], sizes = [6, 8], strides = [1, 1]} : vector<16x8xf32> to vector<6x8xf32>
    %cst_35 = arith.constant dense<0xFF800000> : vector<8xf32>
    %59 = vector.multi_reduction <maximumf>, %58, %cst_35 [0] : vector<6x8xf32> to vector<8xf32>
    %60 = vector.shape_cast %59 : vector<8xf32> to vector<1x8xf32>
    %61 = vector.extract_strided_slice %54 {offsets = [11, 0], sizes = [5, 8], strides = [1, 1]} : vector<16x8xf32> to vector<5x8xf32>
    %cst_36 = arith.constant dense<0xFF800000> : vector<8xf32>
    %62 = vector.multi_reduction <maximumf>, %61, %cst_36 [0] : vector<5x8xf32> to vector<8xf32>
    %63 = vector.shape_cast %62 : vector<8xf32> to vector<1x8xf32>
    %c80_37 = arith.constant 80 : index
    %c0_38 = arith.constant 0 : index
    %64 = vector.load %arg4[%c80_37, %c0_38] : memref<256x8xf32, #tpu.memory_space<vmem>>, vector<16x8xf32>
    %c96_39 = arith.constant 96 : index
    %c0_40 = arith.constant 0 : index
    %65 = vector.load %arg4[%c96_39, %c0_40] : memref<256x8xf32, #tpu.memory_space<vmem>>, vector<16x8xf32>
    %66 = arith.maximumf %64, %65 : vector<16x8xf32>
    %c112_41 = arith.constant 112 : index
    %c0_42 = arith.constant 0 : index
    %67 = vector.load %arg4[%c112_41, %c0_42] : memref<256x8xf32, #tpu.memory_space<vmem>>, vector<16x8xf32>
    %68 = arith.maximumf %66, %67 : vector<16x8xf32>
    %c128_43 = arith.constant 128 : index
    %c0_44 = arith.constant 0 : index
    %69 = vector.load %arg4[%c128_43, %c0_44] : memref<256x8xf32, #tpu.memory_space<vmem>>, vector<16x8xf32>
    %70 = arith.maximumf %68, %69 : vector<16x8xf32>
    %c144_45 = arith.constant 144 : index
    %c0_46 = arith.constant 0 : index
    %71 = vector.load %arg4[%c144_45, %c0_46] : memref<256x8xf32, #tpu.memory_space<vmem>>, vector<16x8xf32>
    %72 = arith.maximumf %70, %71 : vector<16x8xf32>
    %c160_47 = arith.constant 160 : index
    %c0_48 = arith.constant 0 : index
    %73 = vector.load %arg4[%c160_47, %c0_48] : memref<256x8xf32, #tpu.memory_space<vmem>>, vector<16x8xf32>
    %74 = arith.maximumf %72, %73 : vector<16x8xf32>
    %75 = vector.extract_strided_slice %74 {offsets = [0, 0], sizes = [5, 8], strides = [1, 1]} : vector<16x8xf32> to vector<5x8xf32>
    %cst_49 = arith.constant dense<0xFF800000> : vector<8xf32>
    %76 = vector.multi_reduction <maximumf>, %75, %cst_49 [0] : vector<5x8xf32> to vector<8xf32>
    %77 = vector.shape_cast %76 : vector<8xf32> to vector<1x8xf32>
    %78 = vector.extract_strided_slice %74 {offsets = [5, 0], sizes = [6, 8], strides = [1, 1]} : vector<16x8xf32> to vector<6x8xf32>
    %cst_50 = arith.constant dense<0xFF800000> : vector<8xf32>
    %79 = vector.multi_reduction <maximumf>, %78, %cst_50 [0] : vector<6x8xf32> to vector<8xf32>
    %80 = vector.shape_cast %79 : vector<8xf32> to vector<1x8xf32>
    %81 = vector.extract_strided_slice %74 {offsets = [11, 0], sizes = [5, 8], strides = [1, 1]} : vector<16x8xf32> to vector<5x8xf32>
    %cst_51 = arith.constant dense<0xFF800000> : vector<8xf32>
    %82 = vector.multi_reduction <maximumf>, %81, %cst_51 [0] : vector<5x8xf32> to vector<8xf32>
    %83 = vector.shape_cast %82 : vector<8xf32> to vector<1x8xf32>
    %c176_52 = arith.constant 176 : index
    %c0_53 = arith.constant 0 : index
    %84 = vector.load %arg4[%c176_52, %c0_53] : memref<256x8xf32, #tpu.memory_space<vmem>>, vector<16x8xf32>
    %c192_54 = arith.constant 192 : index
    %c0_55 = arith.constant 0 : index
    %85 = vector.load %arg4[%c192_54, %c0_55] : memref<256x8xf32, #tpu.memory_space<vmem>>, vector<16x8xf32>
    %86 = arith.maximumf %84, %85 : vector<16x8xf32>
    %c208_56 = arith.constant 208 : index
    %c0_57 = arith.constant 0 : index
    %87 = vector.load %arg4[%c208_56, %c0_57] : memref<256x8xf32, #tpu.memory_space<vmem>>, vector<16x8xf32>
    %88 = arith.maximumf %86, %87 : vector<16x8xf32>
    %c224_58 = arith.constant 224 : index
    %c0_59 = arith.constant 0 : index
    %89 = vector.load %arg4[%c224_58, %c0_59] : memref<256x8xf32, #tpu.memory_space<vmem>>, vector<16x8xf32>
    %90 = arith.maximumf %88, %89 : vector<16x8xf32>
    %c240_60 = arith.constant 240 : index
    %c0_61 = arith.constant 0 : index
    %91 = vector.load %arg4[%c240_60, %c0_61] : memref<256x8xf32, #tpu.memory_space<vmem>>, vector<16x8xf32>
    %92 = arith.maximumf %90, %91 : vector<16x8xf32>
    %93 = vector.extract_strided_slice %92 {offsets = [0, 0], sizes = [5, 8], strides = [1, 1]} : vector<16x8xf32> to vector<5x8xf32>
    %cst_62 = arith.constant dense<0xFF800000> : vector<8xf32>
    %94 = vector.multi_reduction <maximumf>, %93, %cst_62 [0] : vector<5x8xf32> to vector<8xf32>
    %95 = vector.shape_cast %94 : vector<8xf32> to vector<1x8xf32>
    %96 = vector.extract_strided_slice %92 {offsets = [5, 0], sizes = [6, 8], strides = [1, 1]} : vector<16x8xf32> to vector<6x8xf32>
    %cst_63 = arith.constant dense<0xFF800000> : vector<8xf32>
    %97 = vector.multi_reduction <maximumf>, %96, %cst_63 [0] : vector<6x8xf32> to vector<8xf32>
    %98 = vector.shape_cast %97 : vector<8xf32> to vector<1x8xf32>
    %99 = vector.extract_strided_slice %92 {offsets = [11, 0], sizes = [5, 8], strides = [1, 1]} : vector<16x8xf32> to vector<5x8xf32>
    %cst_64 = arith.constant dense<0xFF800000> : vector<8xf32>
    %100 = vector.multi_reduction <maximumf>, %99, %cst_64 [0] : vector<5x8xf32> to vector<8xf32>
    %101 = vector.shape_cast %100 : vector<8xf32> to vector<1x8xf32>
    %102 = arith.maximumf %21, %24 : vector<1x8xf32>
    %103 = arith.maximumf %102, %42 : vector<1x8xf32>
    %104 = arith.maximumf %103, %45 : vector<1x8xf32>
    %105 = tpu.concatenate %104, %21, %24, %42, %45, %57, %60, %63, %77, %80, %83, %95, %98, %101 in 0 : vector<1x8xf32>, vector<1x8xf32>, vector<1x8xf32>, vector<1x8xf32>, vector<1x8xf32>, vector<1x8xf32>, vector<1x8xf32>, vector<1x8xf32>, vector<1x8xf32>, vector<1x8xf32>, vector<1x8xf32>, vector<1x8xf32>, vector<1x8xf32>, vector<1x8xf32> -> vector<14x8xf32>
    %c0_65 = arith.constant 0 : index
    %c0_66 = arith.constant 0 : index
    %c0_67 = arith.constant 0 : index
    %106 = vector.load %arg3[%c0_65, %c0_66, %c0_67] : memref<1x14x8xf32, #tpu.memory_space<vmem>>, vector<1x14x8xf32>
    %107 = vector.shape_cast %106 : vector<1x14x8xf32> to vector<14x8xf32>
    %108 = vector.shape_cast %105 : vector<14x8xf32> to vector<1x14x8xf32>
    tpu.vector_store %arg3[%c0_65, %c0_66, %c0_67], %108 {strides = array<i32>} : memref<1x14x8xf32, #tpu.memory_space<vmem>>, vector<1x14x8xf32>,
    return
  }
  func.func @transform_0(%arg0: i32, %arg1: i32) -> (i32, i32, i32) {
    %c0_i32 = arith.constant 0 : i32
    %c0_i32_0 = arith.constant 0 : i32
    return %arg0, %arg1, %c0_i32 : i32, i32, i32
  }
  func.func @transform_1(%arg0: i32, %arg1: i32) -> (i32, i32, i32) {
    %c0_i32 = arith.constant 0 : i32
    %c0_i32_0 = arith.constant 0 : i32
    return %arg0, %c0_i32, %arg1 : i32, i32, i32
  }
}

</mosaic_0001>

<llo_original>
// kernel: tpu_custom_call.1
$region0: #{tpu_custom_call.1}
  #allocation0 [shape = 'u32[]', space=smem, size = 0x4, offset = 0x4, fixed_abs, tag = 'smem constant byte address 0x4 - core index']
  #allocation1 [shape = 'u32[72,128]{1,0:T(1,128)}', space=vmem, size = 0x9000, scoped, tag = 'internal scratch']
  #allocation2 [shape = 'f32[256,8]{1,0:T(8,128)}', space=vmem, size = 0x20000, scoped, tag = 'scratch operand']
  %s0 = inlined_call_operand.hbm [shape: f32[2,8,256], index: 0, kind: input, shape index: {}]
  %s1 = inlined_call_operand.vmem [shape: f32[2,14,8], index: 1, kind: output, shape index: {}]
  %s2 = sld [smem:[#allocation0]]
  $region41: #{tpu_custom_call.1} parent=0
    _
  %s4 = ssub.s32 1, %s2
  %s5 = scalar_select 0, %s4, %s2
  $region1: #{tpu_custom_call.1} parent=0
    #allocation3 [shape = 'u8[16384]{0}', space=vmem, size = 0x4000, scoped, tag = 'input window, operand 0']
    #allocation4 [shape = 's32[2]{0}', space=sflag, size = 0x8, scoped, tag = 'scoped memory for tpu_custom_call.1']
    %6 = vsyncpa [#allocation4], 0
    %s7 = scalar_lea.sflag [#allocation4], 1
    %8 = vsyncpa %s7, 0
    loop: start=0, step=1, limit=4
    $region2: #{tpu_custom_call.1} parent=1 // loop_pre_header
      _
    $region3: #{tpu_custom_call.1} parent=1 // loop_header
      %s10 = sphi 0, %s14
      %p11 = scmp.ge.s32.totalorder %s10, 4
      %s17 = sphi 0, %s29
      %s18 = sphi 0, %s25
      %s19 = sphi 0, %s17
      %s20 = sphi 0, %s18
      %s21 = sphi 0, %s19
      %s22 = sphi 0, %s20
      %s34 = sphi 0, %s36
      %s37 = sphi 0, %s34
      %s38 = sphi 0, %s37
      %s54 = sphi 0, %s38
      %s62 = sphi 0, %s64
      %s65 = sphi 0, %s62
      %s66 = sphi 0, %s65
      %s82 = sphi 0, %s66
    $region4: #{tpu_custom_call.1} parent=1 // loop_header_branch
      %13 = sbr.rel (%p11) target = $region8
    $region5: #{tpu_custom_call.1} parent=1 // loop_body
      %s15 = ssub.s32 %s10, 1
      %s16 = ssub.s32 %s10, 2
      %s23 = sadd.s32 1, %s18
      %p24 = scmp.ge.s32.totalorder %s23, 1
      %s25 = scalar_select %p24, 0, %s23
      %s26 = sadd.s32 1, %s17
      %s27 = scalar_select %p24, %s26, %s17
      %p28 = scmp.ge.s32.totalorder %s27, 2
      %s29 = scalar_select %p28, 0, %s27
      %s30 = ssub.s32 %s17, %s29
      %s31 = ssub.s32 %s18, %s25
      %s32 = sor.u32 %s30, %s31
      %p33 = scmp.eq.s32.totalorder %s32, 0
      %s35 = sadd.s32 %s34, 1
      %s36 = scalar_select %p33, %s34, %s35
      %p39 = pneg %p33
      %p40 = scmp.eq.s32.totalorder %s10, 1
      %p41 = por %p39, %p40
      %p42 = scmp.ne.s32.totalorder %s34, %s37
      %p43 = scmp.eq.s32.totalorder %s10, 0
      %p44 = por %p42, %p43
      %p45 = scmp.ne.s32.totalorder %s34, %s37
      %p46 = scmp.eq.s32.totalorder %s15, 1
      %p47 = por %p45, %p46
      %p48 = scmp.ne.s32.totalorder %s37, %s38
      %p49 = scmp.eq.s32.totalorder %s15, 0
      %p50 = por %p48, %p49
      %p51 = scmp.ne.s32.totalorder %s37, %s38
      %p52 = scmp.eq.s32.totalorder %s16, 1
      %p53 = por %p51, %p52
      %p55 = scmp.ne.s32.totalorder %s38, %s54
      %p56 = scmp.eq.s32.totalorder %s16, 0
      %p57 = por %p55, %p56
      %s58 = ssub.s32 %s17, %s29
      %s59 = ssub.s32 %s18, %s25
      %s60 = sor.u32 %s58, %s59
      %p61 = scmp.eq.s32.totalorder %s60, 0
      %s63 = sadd.s32 %s62, 1
      %s64 = scalar_select %p61, %s62, %s63
      %p67 = pneg %p61
      %p68 = scmp.eq.s32.totalorder %s10, 1
      %p69 = por %p67, %p68
      %p70 = scmp.ne.s32.totalorder %s62, %s65
      %p71 = scmp.eq.s32.totalorder %s10, 0
      %p72 = por %p70, %p71
      %p73 = scmp.ne.s32.totalorder %s62, %s65
      %p74 = scmp.eq.s32.totalorder %s15, 1
      %p75 = por %p73, %p74
      %p76 = scmp.ne.s32.totalorder %s65, %s66
      %p77 = scmp.eq.s32.totalorder %s15, 0
      %p78 = por %p76, %p77
      %p79 = scmp.ne.s32.totalorder %s65, %s66
      %p80 = scmp.eq.s32.totalorder %s16, 1
      %p81 = por %p79, %p80
      %p83 = scmp.ne.s32.totalorder %s66, %s82
      %p84 = scmp.eq.s32.totalorder %s16, 0
      %p85 = por %p83, %p84
      %p86 = scmp.le.s32.totalorder 1, %s10
      %p87 = scmp.lt.s32.totalorder %s10, 3
      %p88 = pnand %p86, %p87
      %p89 = pneg %p88
      // Predicated region
      $region9: #{tpu_custom_call.1} parent=5 // pred_check
        _
      $region10: #{tpu_custom_call.1} parent=5 // pred_check_branch
        %91 = sbr.rel (%p88) target = $region12
      $region11: #{tpu_custom_call.1} parent=5 // pred_region
        %s92 = ssub.s32 %s10, 1
      $region12: #{tpu_custom_call.1} parent=5 // pred_fallthru
        _
      %p93 = scmp.lt.s32.totalorder %s10, 2
      // Predicated region
      $region13: #{tpu_custom_call.1} parent=5 // pred_check
        %p94 = pneg %p93
      $region14: #{tpu_custom_call.1} parent=5 // pred_check_branch
        %96 = sbr.rel (%p94) target = $region16
      $region15: #{tpu_custom_call.1} parent=5 // pred_region
        // Predicated region
        $region17: #{tpu_custom_call.1} parent=15 // pred_check
          %p97 = pneg %p44
        $region18: #{tpu_custom_call.1} parent=15 // pred_check_branch
          %99 = sbr.rel (%p97) target = $region20
        $region19: #{tpu_custom_call.1} parent=15 // pred_region
          %s100 = sand.u32 %s34, 1
          %s101 = scalar_lea.sflag [#allocation4], %s100
          %s102 = sand.u32 %s34, 1
          %s103 = smul.addr %s102, 16
          %s104 = scalar_lea.vmem [#allocation3], %s103
          %106 = vsyncadd %s101, 0
          %s107 = smul.addr %s18, 2
          %s108 = smul.addr %s17, 2
          %s109 = sadd.s32 %s107, %s108
          %s110 = smul.addr %s109, 8
          %s111 = scalar_lea.hbm %s0, %s110
          %s113 = sshll.u32 %s111, 4
          %s114 = int_to_ptr.hbm [resolvable:$true] %s113
          %s115 = sshll.u32 %s104, 4
          %s116 = int_to_ptr.vmem [resolvable:$true] %s115
          %118 = dma.hbm_to_vmem [thread:$0]  %s114, 256, %s116, %s101
        $region20: #{tpu_custom_call.1} parent=15 // pred_fallthru
          _
      $region16: #{tpu_custom_call.1} parent=5 // pred_fallthru
        _
      %p119 = scmp.le.s32.totalorder 1, %s10
      %p120 = scmp.lt.s32.totalorder %s10, 3
      %p121 = pnand %p119, %p120
      %p122 = pneg %p121
      // Predicated region
      $region21: #{tpu_custom_call.1} parent=5 // pred_check
        _
      $region22: #{tpu_custom_call.1} parent=5 // pred_check_branch
        %124 = sbr.rel (%p121) target = $region24
      $region23: #{tpu_custom_call.1} parent=5 // pred_region
        %s125 = ssub.s32 %s10, 1
        %s126 = sand.u32 %s37, 1
        %s127 = scalar_lea.sflag [#allocation4], %s126
        %s128 = sand.u32 %s37, 1
        %s129 = smul.addr %s128, 16
        %s130 = scalar_lea.vmem [#allocation3], %s129
        // Predicated region
        $region25: #{tpu_custom_call.1} parent=23 // pred_check
          %p131 = pneg %p50
        $region26: #{tpu_custom_call.1} parent=23 // pred_check_branch
          %133 = sbr.rel (%p131) target = $region28
        $region27: #{tpu_custom_call.1} parent=23 // pred_region
          %135 = dma.done %s127, 256
        $region28: #{tpu_custom_call.1} parent=23 // pred_fallthru
          _
        %s136 = sand.u32 %s37, 1
        %s137 = scalar_lea.sflag [#allocation4], %s136
        %s138 = sand.u32 %s37, 1
        %s139 = smul.addr %s138, 16
        %s140 = scalar_lea.vmem [#allocation3], %s139
        %p141 = pneg %p50
        %p142 = pneg %p47
        %p143 = pneg %p78
        %p144 = pneg %p75
        %p145 = scmp.lt.s32.totalorder %s19, 1
        %s146 = scalar_select %p145, %s19, 1
        %p147 = scmp.lt.s32.totalorder %s20, 0
        %s148 = scalar_select %p147, %s20, 0
        %s149 = smul.addr %s146, 2
        %s150 = sadd.s32 %s148, %s149
        %s151 = smul.addr %s150, 8
        %s152 = scalar_lea.vmem %s1, %s151
        %p153 = scmp.lt.s32.totalorder %s19, 1
        %s154 = scalar_select %p153, %s19, 1
        %p155 = scmp.lt.s32.totalorder %s20, 0
        %s156 = scalar_select %p155, %s20, 0
        %s157 = smul.addr %s154, 2
        %s158 = sadd.s32 %s156, %s157
        %s159 = smul.addr %s158, 8
        %s160 = scalar_lea.vmem %s1, %s159
        %v161 = vld [vmem:[%s130] sm:$0xff]
        %v162 = vld [vmem:[%s130 + $0x8] sm:$0xff]
        %163 = vxpose.xlu0.b32.start [1/16] %v161, 128
        %164 = vxpose.xlu0.b32.cont [2/16] 0.0, 128
        %165 = vxpose.xlu0.b32.cont [3/16] 0.0, 128
        %166 = vxpose.xlu0.b32.cont [4/16] 0.0, 128
        %167 = vxpose.xlu0.b32.cont [5/16] 0.0, 128
        %168 = vxpose.xlu0.b32.cont [6/16] 0.0, 128
        %169 = vxpose.xlu0.b32.cont [7/16] 0.0, 128
        %170 = vxpose.xlu0.b32.cont [8/16] 0.0, 128
        %171 = vxpose.xlu0.b32.cont [9/16] 0.0, 128
        %172 = vxpose.xlu0.b32.cont [10/16] 0.0, 128
        %173 = vxpose.xlu0.b32.cont [11/16] 0.0, 128
        %174 = vxpose.xlu0.b32.cont [12/16] 0.0, 128
        %175 = vxpose.xlu0.b32.cont [13/16] 0.0, 128
        %176 = vxpose.xlu0.b32.cont [14/16] 0.0, 128
        %177 = vxpose.xlu0.b32.cont [15/16] 0.0, 128
        %178 = vxpose.xlu0.b32.end [16/16] 0.0, 128
        %v179 = vpop.trf.xlu0
        %v180 = vpop.trf.xlu0
        %v181 = vpop.trf.xlu0
        %v182 = vpop.trf.xlu0
        %v183 = vpop.trf.xlu0
        %v184 = vpop.trf.xlu0
        %v185 = vpop.trf.xlu0
        %v186 = vpop.trf.xlu0
        %v187 = vpop.trf.xlu0
        %v188 = vpop.trf.xlu0
        %v189 = vpop.trf.xlu0
        %v190 = vpop.trf.xlu0
        %v191 = vpop.trf.xlu0
        %v192 = vpop.trf.xlu0
        %v193 = vpop.trf.xlu0
        %v194 = vpop.trf.xlu0
        %195 = vxpose.xlu0.b32.start [1/16] %v162, 128
        %196 = vxpose.xlu0.b32.cont [2/16] 0.0, 128
        %197 = vxpose.xlu0.b32.cont [3/16] 0.0, 128
        %198 = vxpose.xlu0.b32.cont [4/16] 0.0, 128
        %199 = vxpose.xlu0.b32.cont [5/16] 0.0, 128
        %200 = vxpose.xlu0.b32.cont [6/16] 0.0, 128
        %201 = vxpose.xlu0.b32.cont [7/16] 0.0, 128
        %202 = vxpose.xlu0.b32.cont [8/16] 0.0, 128
        %203 = vxpose.xlu0.b32.cont [9/16] 0.0, 128
        %204 = vxpose.xlu0.b32.cont [10/16] 0.0, 128
        %205 = vxpose.xlu0.b32.cont [11/16] 0.0, 128
        %206 = vxpose.xlu0.b32.cont [12/16] 0.0, 128
        %207 = vxpose.xlu0.b32.cont [13/16] 0.0, 128
        %208 = vxpose.xlu0.b32.cont [14/16] 0.0, 128
        %209 = vxpose.xlu0.b32.cont [15/16] 0.0, 128
        %210 = vxpose.xlu0.b32.end [16/16] 0.0, 128
        %v211 = vpop.trf.xlu0
        %v212 = vpop.trf.xlu0
        %v213 = vpop.trf.xlu0
        %v214 = vpop.trf.xlu0
        %v215 = vpop.trf.xlu0
        %v216 = vpop.trf.xlu0
        %v217 = vpop.trf.xlu0
        %v218 = vpop.trf.xlu0
        %v219 = vpop.trf.xlu0
        %v220 = vpop.trf.xlu0
        %v221 = vpop.trf.xlu0
        %v222 = vpop.trf.xlu0
        %v223 = vpop.trf.xlu0
        %v224 = vpop.trf.xlu0
        %v225 = vpop.trf.xlu0
        %v226 = vpop.trf.xlu0
        %vm227 = vcmask 64512
        %228 = vst.msk [vmem:[#allocation2] sm:$0xff] %vm227, %v179
        %229 = vst.msk [vmem:[#allocation2 + $0x8] sm:$0xff] %vm227, %v180
        %230 = vst.msk [vmem:[#allocation2 + $0x10] sm:$0xff] %vm227, %v181
        %231 = vst.msk [vmem:[#allocation2 + $0x18] sm:$0xff] %vm227, %v182
        %232 = vst.msk [vmem:[#allocation2 + $0x20] sm:$0xff] %vm227, %v183
        %233 = vst.msk [vmem:[#allocation2 + $0x28] sm:$0xff] %vm227, %v184
        %234 = vst.msk [vmem:[#allocation2 + $0x30] sm:$0xff] %vm227, %v185
        %235 = vst.msk [vmem:[#allocation2 + $0x38] sm:$0xff] %vm227, %v186
        %236 = vst.msk [vmem:[#allocation2 + $0x40] sm:$0xff] %vm227, %v187
        %237 = vst.msk [vmem:[#allocation2 + $0x48] sm:$0xff] %vm227, %v188
        %238 = vst.msk [vmem:[#allocation2 + $0x50] sm:$0xff] %vm227, %v189
        %239 = vst.msk [vmem:[#allocation2 + $0x58] sm:$0xff] %vm227, %v190
        %240 = vst.msk [vmem:[#allocation2 + $0x60] sm:$0xff] %vm227, %v191
        %241 = vst.msk [vmem:[#allocation2 + $0x68] sm:$0xff] %vm227, %v192
        %242 = vst.msk [vmem:[#allocation2 + $0x70] sm:$0xff] %vm227, %v193
        %243 = vst.msk [vmem:[#allocation2 + $0x78] sm:$0xff] %vm227, %v194
        %244 = vst.msk [vmem:[#allocation2 + $0x80] sm:$0xff] %vm227, %v211
        %245 = vst.msk [vmem:[#allocation2 + $0x88] sm:$0xff] %vm227, %v212
        %246 = vst.msk [vmem:[#allocation2 + $0x90] sm:$0xff] %vm227, %v213
        %247 = vst.msk [vmem:[#allocation2 + $0x98] sm:$0xff] %vm227, %v214
        %248 = vst.msk [vmem:[#allocation2 + $0xa0] sm:$0xff] %vm227, %v215
        %249 = vst.msk [vmem:[#allocation2 + $0xa8] sm:$0xff] %vm227, %v216
        %250 = vst.msk [vmem:[#allocation2 + $0xb0] sm:$0xff] %vm227, %v217
        %251 = vst.msk [vmem:[#allocation2 + $0xb8] sm:$0xff] %vm227, %v218
        %252 = vst.msk [vmem:[#allocation2 + $0xc0] sm:$0xff] %vm227, %v219
        %253 = vst.msk [vmem:[#allocation2 + $0xc8] sm:$0xff] %vm227, %v220
        %254 = vst.msk [vmem:[#allocation2 + $0xd0] sm:$0xff] %vm227, %v221
        %255 = vst.msk [vmem:[#allocation2 + $0xd8] sm:$0xff] %vm227, %v222
        %256 = vst.msk [vmem:[#allocation2 + $0xe0] sm:$0xff] %vm227, %v223
        %257 = vst.msk [vmem:[#allocation2 + $0xe8] sm:$0xff] %vm227, %v224
        %258 = vst.msk [vmem:[#allocation2 + $0xf0] sm:$0xff] %vm227, %v225
        %259 = vst.msk [vmem:[#allocation2 + $0xf8] sm:$0xff] %vm227, %v226
        %v260 = vld [vmem:[#allocation2] sm:$0xff]
        %v261 = vld [vmem:[#allocation2 + $0x8] sm:$0xff]
        %v262 = vld [vmem:[#allocation2 + $0x10] sm:$0xff]
        %v263 = vld [vmem:[#allocation2 + $0x18] sm:$0xff]
        %v264 = vmax.f32 %v260, %v262
        %v265 = vmax.f32 %v261, %v263
        %v266 = vld [vmem:[#allocation2 + $0x20] sm:$0xff]
        %v267 = vld [vmem:[#allocation2 + $0x28] sm:$0xff]
        %v268 = vmax.f32 %v264, %v266
        %v269 = vmax.f32 %v265, %v267
        %v270 = vld [vmem:[#allocation2 + $0x30] sm:$0xff]
        %v271 = vld [vmem:[#allocation2 + $0x38] sm:$0xff]
        %v272 = vmax.f32 %v268, %v270
        %v273 = vmax.f32 %v269, %v271
        %v274 = vld [vmem:[#allocation2 + $0x40] sm:$0xff]
        %v275 = vld [vmem:[#allocation2 + $0x48] sm:$0xff]
        %v276 = vmax.f32 %v272, %v274
        %v277 = vmax.f32 %v273, %v275
        %v278 = vld [vmem:[#allocation2 + $0x50] sm:$0xff]
        %v279 = vld [vmem:[#allocation2 + $0x58] sm:$0xff]
        %v280 = vmax.f32 %v276, %v278
        %v281 = vmax.f32 %v277, %v279
        %v282 = vld [vmem:[#allocation2 + $0x60] sm:$0xff]
        %v283 = vld [vmem:[#allocation2 + $0x68] sm:$0xff]
        %v284 = vmax.f32 %v280, %v282
        %v285 = vmax.f32 %v281, %v283
        %v286 = vld [vmem:[#allocation2 + $0x70] sm:$0xff]
        %v287 = vld [vmem:[#allocation2 + $0x78] sm:$0xff]
        %v288 = vmax.f32 %v284, %v286
        %v289 = vmax.f32 %v285, %v287
        %v290 = vsel %vm227, %v288, -inf
        %v291 = vrot.slane %v290, 4
        %v292 = vmax.f32 %v290, %v291
        %v293 = vrot.slane %v292, 2
        %v294 = vmax.f32 %v292, %v293
        %v295 = vrot.slane %v294, 1
        %v296 = vmax.f32 %v294, %v295
        %v297 = vsel %vm227, %v289, -inf
        %v298 = vrot.slane %v297, 4
        %v299 = vmax.f32 %v297, %v298
        %v300 = vrot.slane %v299, 2
        %v301 = vmax.f32 %v299, %v300
        %v302 = vrot.slane %v301, 1
        %v303 = vmax.f32 %v301, %v302
        %v304 = vld [vmem:[#allocation2 + $0x80] sm:$0xff]
        %v305 = vld [vmem:[#allocation2 + $0x88] sm:$0xff]
        %v306 = vld [vmem:[#allocation2 + $0x90] sm:$0xff]
        %v307 = vld [vmem:[#allocation2 + $0x98] sm:$0xff]
        %v308 = vmax.f32 %v304, %v306
        %v309 = vmax.f32 %v305, %v307
        %v310 = vld [vmem:[#allocation2 + $0xa0] sm:$0xff]
        %v311 = vld [vmem:[#allocation2 + $0xa8] sm:$0xff]
        %v312 = vmax.f32 %v308, %v310
        %v313 = vmax.f32 %v309, %v311
        %v314 = vld [vmem:[#allocation2 + $0xb0] sm:$0xff]
        %v315 = vld [vmem:[#allocation2 + $0xb8] sm:$0xff]
        %v316 = vmax.f32 %v312, %v314
        %v317 = vmax.f32 %v313, %v315
        %v318 = vld [vmem:[#allocation2 + $0xc0] sm:$0xff]
        %v319 = vld [vmem:[#allocation2 + $0xc8] sm:$0xff]
        %v320 = vmax.f32 %v316, %v318
        %v321 = vmax.f32 %v317, %v319
        %v322 = vld [vmem:[#allocation2 + $0xd0] sm:$0xff]
        %v323 = vld [vmem:[#allocation2 + $0xd8] sm:$0xff]
        %v324 = vmax.f32 %v320, %v322
        %v325 = vmax.f32 %v321, %v323
        %v326 = vld [vmem:[#allocation2 + $0xe0] sm:$0xff]
        %v327 = vld [vmem:[#allocation2 + $0xe8] sm:$0xff]
        %v328 = vmax.f32 %v324, %v326
        %v329 = vmax.f32 %v325, %v327
        %v330 = vld [vmem:[#allocation2 + $0xf0] sm:$0xff]
        %v331 = vld [vmem:[#allocation2 + $0xf8] sm:$0xff]
        %v332 = vmax.f32 %v328, %v330
        %v333 = vmax.f32 %v329, %v331
        %v334 = vsel %vm227, %v332, -inf
        %v335 = vrot.slane %v334, 4
        %v336 = vmax.f32 %v334, %v335
        %v337 = vrot.slane %v336, 2
        %v338 = vmax.f32 %v336, %v337
        %v339 = vrot.slane %v338, 1
        %v340 = vmax.f32 %v338, %v339
        %v341 = vsel %vm227, %v333, -inf
        %v342 = vrot.slane %v341, 4
        %v343 = vmax.f32 %v341, %v342
        %v344 = vrot.slane %v343, 2
        %v345 = vmax.f32 %v343, %v344
        %v346 = vrot.slane %v345, 1
        %v347 = vmax.f32 %v345, %v346
        %vm348 = vcmask 61440
        %v349 = vsel %vm348, %v276, -inf
        %v350 = vrot.slane %v349, 4
        %v351 = vmax.f32 %v349, %v350
        %v352 = vrot.slane %v351, 2
        %v353 = vmax.f32 %v351, %v352
        %v354 = vrot.slane %v353, 1
        %v355 = vmax.f32 %v353, %v354
        %vm356 = vcmask 64517
        %v357 = vsel %vm356, %v276, -inf
        %vm358 = vcmask 59392
        %v359 = vsel %vm358, %v277, -inf
        %v360 = vmax.f32 %v357, %v359
        %v361 = vrot.slane %v360, 4
        %v362 = vmax.f32 %v360, %v361
        %v363 = vrot.slane %v362, 2
        %v364 = vmax.f32 %v362, %v363
        %v365 = vrot.slane %v364, 1
        %v366 = vmax.f32 %v364, %v365
        %vm367 = vcmask 64515
        %v368 = vsel %vm367, %v277, -inf
        %v369 = vrot.slane %v368, 4
        %v370 = vmax.f32 %v368, %v369
        %v371 = vrot.slane %v370, 2
        %v372 = vmax.f32 %v370, %v371
        %v373 = vrot.slane %v372, 1
        %v374 = vmax.f32 %v372, %v373
        %v375 = vmax.f32 %v278, %v282
        %v376 = vmax.f32 %v279, %v283
        %v377 = vmax.f32 %v375, %v286
        %v378 = vmax.f32 %v376, %v287
        %v379 = vmax.f32 %v377, %v304
        %v380 = vmax.f32 %v378, %v305
        %v381 = vmax.f32 %v379, %v306
        %v382 = vmax.f32 %v380, %v307
        %v383 = vmax.f32 %v381, %v310
        %v384 = vmax.f32 %v382, %v311
        %v385 = vsel %vm348, %v383, -inf
        %v386 = vrot.slane %v385, 4
        %v387 = vmax.f32 %v385, %v386
        %v388 = vrot.slane %v387, 2
        %v389 = vmax.f32 %v387, %v388
        %v390 = vrot.slane %v389, 1
        %v391 = vmax.f32 %v389, %v390
        %v392 = vsel %vm356, %v383, -inf
        %v393 = vsel %vm358, %v384, -inf
        %v394 = vmax.f32 %v392, %v393
        %v395 = vrot.slane %v394, 4
        %v396 = vmax.f32 %v394, %v395
        %v397 = vrot.slane %v396, 2
        %v398 = vmax.f32 %v396, %v397
        %v399 = vrot.slane %v398, 1
        %v400 = vmax.f32 %v398, %v399
        %v401 = vsel %vm367, %v384, -inf
        %v402 = vrot.slane %v401, 4
        %v403 = vmax.f32 %v401, %v402
        %v404 = vrot.slane %v403, 2
        %v405 = vmax.f32 %v403, %v404
        %v406 = vrot.slane %v405, 1
        %v407 = vmax.f32 %v405, %v406
        %v408 = vmax.f32 %v314, %v318
        %v409 = vmax.f32 %v315, %v319
        %v410 = vmax.f32 %v408, %v322
        %v411 = vmax.f32 %v409, %v323
        %v412 = vmax.f32 %v410, %v326
        %v413 = vmax.f32 %v411, %v327
        %v414 = vmax.f32 %v412, %v330
        %v415 = vmax.f32 %v413, %v331
        %v416 = vsel %vm348, %v414, -inf
        %v417 = vrot.slane %v416, 4
        %v418 = vmax.f32 %v416, %v417
        %v419 = vrot.slane %v418, 2
        %v420 = vmax.f32 %v418, %v419
        %v421 = vrot.slane %v420, 1
        %v422 = vmax.f32 %v420, %v421
        %v423 = vsel %vm356, %v414, -inf
        %v424 = vsel %vm358, %v415, -inf
        %v425 = vmax.f32 %v423, %v424
        %v426 = vrot.slane %v425, 4
        %v427 = vmax.f32 %v425, %v426
        %v428 = vrot.slane %v427, 2
        %v429 = vmax.f32 %v427, %v428
        %v430 = vrot.slane %v429, 1
        %v431 = vmax.f32 %v429, %v430
        %v432 = vsel %vm367, %v415, -inf
        %v433 = vrot.slane %v432, 4
        %v434 = vmax.f32 %v432, %v433
        %v435 = vrot.slane %v434, 2
        %v436 = vmax.f32 %v434, %v435
        %v437 = vrot.slane %v436, 1
        %v438 = vmax.f32 %v436, %v437
        %v439 = vmax.f32 %v296, %v303
        %v440 = vmax.f32 %v439, %v340
        %v441 = vmax.f32 %v440, %v347
        %vm442 = vcmask 1040384
        %v443 = vsel %vm442, %v441, %v296
        %vm444 = vcmask 1041408
        %v445 = vsel %vm444, %v443, %v303
        %vm446 = vcmask 1042432
        %v447 = vsel %vm446, %v445, %v340
        %vm448 = vcmask 1043456
        %v449 = vsel %vm448, %v447, %v347
        %vm450 = vcmask 1044480
        %v451 = vsel %vm450, %v449, %v355
        %vm452 = vcmask 1045504
        %v453 = vsel %vm452, %v451, %v366
        %vm454 = vcmask 1046528
        %v455 = vsel %vm454, %v453, %v374
        %v456 = vsel %vm442, %v391, %v400
        %v457 = vsel %vm444, %v456, %v407
        %v458 = vsel %vm446, %v457, %v422
        %v459 = vsel %vm448, %v458, %v431
        %v460 = vsel %vm450, %v459, %v438
        %461 = vst.msk [vmem:[%s160] sm:$0xff] %vm227, %v455
        %vm462 = vcmask 62464
        %463 = vst.msk [vmem:[%s160 + $0x8] sm:$0x3f] %vm462, %v460
        %p464 = scmp.lt.s32.totalorder %s19, 1
        %s465 = scalar_select %p464, %s19, 1
        %p466 = scmp.lt.s32.totalorder %s20, 0
        %s467 = scalar_select %p466, %s20, 0
        %s468 = smul.addr %s465, 2
        %s469 = sadd.s32 %s467, %s468
        %s470 = smul.addr %s469, 8
        %s471 = scalar_lea.vmem %s1, %s470
        // Predicated region
        $region29: #{tpu_custom_call.1} parent=23 // pred_check
          %p472 = pneg %p75
        $region30: #{tpu_custom_call.1} parent=23 // pred_check_branch
          %474 = sbr.rel (%p472) target = $region32
        $region31: #{tpu_custom_call.1} parent=23 // pred_region
          _
        $region32: #{tpu_custom_call.1} parent=23 // pred_fallthru
          _
      $region24: #{tpu_custom_call.1} parent=5 // pred_fallthru
        _
      %p475 = scmp.le.s32.totalorder 2, %s10
      // Predicated region
      $region33: #{tpu_custom_call.1} parent=5 // pred_check
        %p476 = pneg %p475
      $region34: #{tpu_custom_call.1} parent=5 // pred_check_branch
        %478 = sbr.rel (%p476) target = $region36
      $region35: #{tpu_custom_call.1} parent=5 // pred_region
        %s479 = ssub.s32 %s10, 2
        // Predicated region
        $region37: #{tpu_custom_call.1} parent=35 // pred_check
          %p480 = pneg %p81
        $region38: #{tpu_custom_call.1} parent=35 // pred_check_branch
          %482 = sbr.rel (%p480) target = $region40
        $region39: #{tpu_custom_call.1} parent=35 // pred_region
          %p483 = scmp.lt.s32.totalorder %s21, 1
          %s484 = scalar_select %p483, %s21, 1
          %p485 = scmp.lt.s32.totalorder %s22, 0
          %s486 = scalar_select %p485, %s22, 0
          %s487 = smul.addr %s484, 2
          %s488 = sadd.s32 %s486, %s487
          %s489 = smul.addr %s488, 8
          %s490 = scalar_lea.vmem %s1, %s489
        $region40: #{tpu_custom_call.1} parent=35 // pred_fallthru
          _
      $region36: #{tpu_custom_call.1} parent=5 // pred_fallthru
        _
    $region6: #{tpu_custom_call.1} parent=1 // loop_footer
      %s14 = sadd.s32 1, %s10
    $region7: #{tpu_custom_call.1} parent=1 // loop_footer_branch
      %9 = sbr.rel target = $region3
    $region8: #{tpu_custom_call.1} parent=1 // loop_exit
      _
    %491 = vsyncpa [#allocation4], 1
    %s492 = scalar_lea.sflag [#allocation4], 1
    %493 = vsyncpa %s492, 1

</llo_original>
